<compile_context>
chip_gen: v5e
topology: v5e:2x2
jax: 0.10.0
libtpu: 0.0.40
codegen_flags: <defaults>
</compile_context>

<pallas_src>
import functools

import jax
import jax.numpy as jnp
from jax.experimental import pallas as pl
from jax.experimental.pallas import tpu as pltpu

_LANES = 128


def _cdiv(a, b):
    return (a + b - 1) // b


def _round_up(a, b):
    return _cdiv(a, b) * b


def _static_pow(x, gamma):
    """x ** gamma; integer gamma lowers to a few VPU multiplies (exact for negative logits)."""
    g = float(gamma)
    if g.is_integer() and g >= 0:
        k = int(g)
        if k == 0:
            return jnp.ones_like(x)
        acc = None
        base = x
        while k:
            if k & 1:
                acc = base if acc is None else acc * base
            k >>= 1
            if k:
                base = base * base
        return acc
    # Non-integer gamma on raw (possibly negative) logits gives NaN, same as torch.pow.
    return x ** g


def _focal_loss_kernel(pred_ref, t_ref, out_ref, acc_ce, acc_mk, *, gamma):
    b = pl.program_id(0)
    nb = pl.num_programs(0)
    blk = t_ref.shape[0]

    @pl.when(b == 0)
    def _():
        acc_ce[...] = jnp.zeros_like(acc_ce)
        acc_mk[...] = jnp.zeros_like(acc_mk)

    # Load native dtype, compute in f32.
    p0 = pred_ref[0].astype(jnp.float32)          # (blk, 128)
    p1 = pred_ref[1].astype(jnp.float32)          # (blk, 128)
    t_f = t_ref[...].astype(jnp.float32)          # 0 / 1, or -1 for padding

    # Closed-form binary cross-entropy: ce = softplus(other - picked)
    #   picked/other selected without jnp.where: d = (p1 - p0) * (1 - 2*t)
    d = (p1 - p0) * (1.0 - 2.0 * t_f)
    ce = jnp.maximum(d, 0.0) + jnp.log1p(jnp.exp(-jnp.abs(d)))

    # Focal mask on raw logits (exactly as the PyTorch module), select-free form.
    pw0 = _static_pow(p0, gamma)
    pw1 = _static_pow(p1, gamma)
    mask = pw1 + t_f * (pw0 - pw1)

    def _accumulate(ce_v, mask_v):
        # Per-tile reduction into a single-vreg (8, 128) accumulator.
        acc_ce[...] += ce_v.reshape(blk // 8, 8, _LANES).sum(axis=0)
        acc_mk[...] += mask_v.reshape(blk // 8, 8, _LANES).sum(axis=0)

    # Interior blocks: no padding possible -> plain accumulate.
    @pl.when(b < nb - 1)
    def _():
        _accumulate(ce, mask)

    # Tail block: mask out padded elements (targets padded with -1), then finalize.
    @pl.when(b == nb - 1)
    def _():
        valid = t_f >= 0.0
        _accumulate(jnp.where(valid, ce, 0.0), jnp.where(valid, mask, 0.0))
        ce_sum = jnp.sum(acc_ce[...])
        mk_sum = jnp.sum(acc_mk[...])
        row = jax.lax.broadcasted_iota(jnp.int32, out_ref.shape, 0)
        out_ref[...] = jnp.where(row == 0, ce_sum,
                                 jnp.where(row == 1, mk_sum, 0.0))


def focal_loss(pred_y, targets, gamma=2.0, *, block_rows=2048):
    """pred_y: (N, 2) float logits (any float dtype); targets: (N,) int labels. Returns scalar f32."""
    # TODO(synk): class-weighted CE (weight is not None) not implemented; module default is weight=None.
    n, c = pred_y.shape
    assert c == 2, "focal mask uses pred[:, 0] / pred[:, 1]; only C == 2 is supported"

    # Lane-dense re-layout: logits -> single (2, rows_pad, 128) array (one XLA pass),
    # targets -> int8 (rows_pad, 128) padded with -1 (pad sentinel == validity flag).
    rows = _cdiv(n, _LANES)
    blk = min(_round_up(block_rows, 32), _round_up(max(rows, 1), 32))
    blocks = _cdiv(rows, blk)
    rows_pad = blocks * blk
    pad = rows_pad * _LANES - n

    pred2 = jnp.pad(pred_y.T, ((0, 0), (0, pad))).reshape(2, rows_pad, _LANES)
    tl = jnp.pad(targets.astype(jnp.int8), (0, pad),
                 constant_values=-1).reshape(rows_pad, _LANES)

    partials = pl.pallas_call(
        functools.partial(_focal_loss_kernel, gamma=float(gamma)),
        out_shape=jax.ShapeDtypeStruct((8, _LANES), jnp.float32),
        grid_spec=pltpu.PrefetchScalarGridSpec(
            num_scalar_prefetch=0,
            grid=(blocks,),
            in_specs=[pl.BlockSpec((2, blk, _LANES), lambda b: (0, b, 0)),
                      pl.BlockSpec((blk, _LANES), lambda b: (b, 0))],
            out_specs=pl.BlockSpec((8, _LANES), lambda b: (0, 0)),
            scratch_shapes=[pltpu.VMEM((8, _LANES), jnp.float32),
                            pltpu.VMEM((8, _LANES), jnp.float32)]),
        compiler_params=pltpu.CompilerParams(
            dimension_semantics=("arbitrary",)),
    )(pred2, tl)

    ce_mean = partials[0, 0] / jnp.float32(n)
    mask_mean = partials[1, 0] / jnp.float32(n)
    return mask_mean * ce_mean


def focal_loss_ref(pred_y, targets, gamma=2.0):
    """Pure-JAX reference mirroring the PyTorch forward."""
    pred = pred_y.astype(jnp.float32)
    logp = jax.nn.log_softmax(pred, axis=1)
    ce = -jnp.take_along_axis(logp, targets.astype(jnp.int32)[:, None], axis=1)[:, 0]
    ce_loss = jnp.mean(ce)
    g = int(gamma) if float(gamma).is_integer() else gamma
    t_f = targets.astype(jnp.float32)
    mask = t_f * pred[:, 0] ** g + (1.0 - t_f) * pred[:, 1] ** g
    return jnp.mean(mask * ce_loss)


if __name__ == "__main__":
    key = jax.random.PRNGKey(0)
    k1, k2, k3, k4 = jax.random.split(key, 4)

    # Small binary-classification batch; odd N exercises the padding mask.
    N, C = 300, 2
    pred_y = jax.random.normal(k1, (N, C), dtype=jnp.float32)
    targets = jax.random.randint(k2, (N,), 0, C, dtype=jnp.int32)
    out = jax.block_until_ready(focal_loss(pred_y, targets, gamma=2.0))
    ref = jax.block_until_ready(focal_loss_ref(pred_y, targets, gamma=2.0))
    assert jnp.allclose(out, ref, rtol=1e-5, atol=1e-5), (out, ref)

    # bf16 logits (cast happens in-kernel), gamma=3, different odd N.
    N2 = 257
    pred2 = jax.random.normal(k3, (N2, C), dtype=jnp.bfloat16)
    tgt2 = jax.random.randint(k2, (N2,), 0, C, dtype=jnp.int32)
    out2 = jax.block_until_ready(focal_loss(pred2, tgt2, gamma=3.0))
    ref2 = jax.block_until_ready(focal_loss_ref(pred2, tgt2, gamma=3.0))
    assert jnp.allclose(out2, ref2, rtol=1e-4, atol=1e-4), (out2, ref2)

    # Multi-block grid with a padded tail block (exercises interior/tail gating).
    N3 = 8191
    pred3 = jax.random.normal(k4, (N3, C), dtype=jnp.float32)
    tgt3 = jax.random.randint(k2, (N3,), 0, C, dtype=jnp.int32)
    out3 = jax.block_until_ready(focal_loss(pred3, tgt3, gamma=2.0, block_rows=32))
    ref3 = jax.block_until_ready(focal_loss_ref(pred3, tgt3, gamma=2.0))
    assert jnp.allclose(out3, ref3, rtol=1e-4, atol=1e-5), (out3, ref3)

    print("KERNEL_OK")
</pallas_src>

<mosaic_0001>
module attributes {stable_mosaic.version = 11 : i64} {
  func.func @_focal_loss_kernel(%arg0: i32, %arg1: memref<2x32x128xf32, #tpu.memory_space<vmem>>, %arg2: memref<32x128xi8, #tpu.memory_space<vmem>>, %arg3: memref<8x128xf32, #tpu.memory_space<vmem>>, %arg4: memref<8x128xf32, #tpu.memory_space<vmem>>, %arg5: memref<8x128xf32, #tpu.memory_space<vmem>>) attributes {dimension_semantics = [#tpu.dimension_semantics<arbitrary>], iteration_bounds = array<i64: 1>, scalar_prefetch = 0 : i64, scratch_operands = 2 : i64, tpu.core_type = #tpu.core_type<tc>, window_params = [{transform_indices = @transform_0, window_bounds = array<i64: 2, 32, 128>}, {transform_indices = @transform_1, window_bounds = array<i64: 32, 128>}, {pipeline_mode = #tpu.pipeline_mode<synchronous>, transform_indices = @transform_2, window_bounds = array<i64: 8, 128>}]} {
    %c0_i32 = arith.constant 0 : i32
    %0 = arith.cmpi eq, %arg0, %c0_i32 : i32
    %1 = arith.extui %0 : i1 to i32
    %c0_i32_0 = arith.constant 0 : i32
    %2 = arith.cmpi ne, %1, %c0_i32_0 : i32
    scf.if %2 {
      %cst_14 = arith.constant 0.000000e+00 : f32
      %34 = vector.broadcast %cst_14 : f32 to vector<8x128xf32>
      %c0_15 = arith.constant 0 : index
      %c0_16 = arith.constant 0 : index
      %35 = vector.load %arg4[%c0_15, %c0_16] : memref<8x128xf32, #tpu.memory_space<vmem>>, vector<8x128xf32>
      tpu.vector_store %arg4[%c0_15, %c0_16], %34 {strides = array<i32>} : memref<8x128xf32, #tpu.memory_space<vmem>>, vector<8x128xf32>,
      %cst_17 = arith.constant 0.000000e+00 : f32
      %36 = vector.broadcast %cst_17 : f32 to vector<8x128xf32>
      %c0_18 = arith.constant 0 : index
      %c0_19 = arith.constant 0 : index
      %37 = vector.load %arg5[%c0_18, %c0_19] : memref<8x128xf32, #tpu.memory_space<vmem>>, vector<8x128xf32>
      tpu.vector_store %arg5[%c0_18, %c0_19], %36 {strides = array<i32>} : memref<8x128xf32, #tpu.memory_space<vmem>>, vector<8x128xf32>,
    } else {
    }
    %c0 = arith.constant 0 : index
    %c0_1 = arith.constant 0 : index
    %c0_2 = arith.constant 0 : index
    %3 = vector.load %arg1[%c0, %c0_1, %c0_2] : memref<2x32x128xf32, #tpu.memory_space<vmem>>, vector<1x32x128xf32>
    %4 = vector.shape_cast %3 : vector<1x32x128xf32> to vector<32x128xf32>
    %c1 = arith.constant 1 : index
    %c0_3 = arith.constant 0 : index
    %c0_4 = arith.constant 0 : index
    %5 = vector.load %arg1[%c1, %c0_3, %c0_4] : memref<2x32x128xf32, #tpu.memory_space<vmem>>, vector<1x32x128xf32>
    %6 = vector.shape_cast %5 : vector<1x32x128xf32> to vector<32x128xf32>
    %c0_5 = arith.constant 0 : index
    %c0_6 = arith.constant 0 : index
    %7 = vector.load %arg2[%c0_5, %c0_6] : memref<32x128xi8, #tpu.memory_space<vmem>>, vector<32x128xi8>
    %8 = arith.sitofp %7 : vector<32x128xi8> to vector<32x128xf32>
    %9 = arith.subf %6, %4 : vector<32x128xf32>
    %cst = arith.constant 2.000000e+00 : f32
    %10 = vector.broadcast %cst : f32 to vector<32x128xf32>
    %11 = arith.mulf %10, %8 : vector<32x128xf32>
    %cst_7 = arith.constant 1.000000e+00 : f32
    %12 = vector.broadcast %cst_7 : f32 to vector<32x128xf32>
    %13 = arith.subf %12, %11 : vector<32x128xf32>
    %14 = arith.mulf %9, %13 : vector<32x128xf32>
    %cst_8 = arith.constant 0.000000e+00 : f32
    %15 = vector.broadcast %cst_8 : f32 to vector<32x128xf32>
    %16 = arith.maximumf %14, %15 : vector<32x128xf32>
    %17 = math.absf %14 : vector<32x128xf32>
    %cst_9 = arith.constant 0.000000e+00 : f32
    %18 = vector.broadcast %cst_9 : f32 to vector<32x128xf32>
    %19 = arith.subf %18, %17 : vector<32x128xf32>
    %20 = math.exp %19 : vector<32x128xf32>
    %21 = math.log1p %20 : vector<32x128xf32>
    %22 = arith.addf %16, %21 : vector<32x128xf32>
    %23 = arith.mulf %4, %4 : vector<32x128xf32>
    %24 = arith.mulf %6, %6 : vector<32x128xf32>
    %25 = arith.subf %23, %24 : vector<32x128xf32>
    %26 = arith.mulf %8, %25 : vector<32x128xf32>
    %27 = arith.addf %24, %26 : vector<32x128xf32>
    %c0_i32_10 = arith.constant 0 : i32
    %28 = arith.cmpi slt, %arg0, %c0_i32_10 : i32
    %29 = arith.extui %28 : i1 to i32
    %c0_i32_11 = arith.constant 0 : i32
    %30 = arith.cmpi ne, %29, %c0_i32_11 : i32
    scf.if %30 {
      %c0_14 = arith.constant 0 : index
      %c0_15 = arith.constant 0 : index
      %34 = vector.load %arg4[%c0_14, %c0_15] : memref<8x128xf32, #tpu.memory_space<vmem>>, vector<8x128xf32>
      %35 = vector.shape_cast %22 : vector<32x128xf32> to vector<4x8x128xf32>
      %cst_16 = arith.constant dense<0.000000e+00> : vector<8x128xf32>
      %36 = vector.multi_reduction <add>, %35, %cst_16 [0] : vector<4x8x128xf32> to vector<8x128xf32>
      %37 = arith.addf %34, %36 : vector<8x128xf32>
      %c0_17 = arith.constant 0 : index
      %c0_18 = arith.constant 0 : index
      %38 = vector.load %arg4[%c0_17, %c0_18] : memref<8x128xf32, #tpu.memory_space<vmem>>, vector<8x128xf32>
      tpu.vector_store %arg4[%c0_17, %c0_18], %37 {strides = array<i32>} : memref<8x128xf32, #tpu.memory_space<vmem>>, vector<8x128xf32>,
      %c0_19 = arith.constant 0 : index
      %c0_20 = arith.constant 0 : index
      %39 = vector.load %arg5[%c0_19, %c0_20] : memref<8x128xf32, #tpu.memory_space<vmem>>, vector<8x128xf32>
      %40 = vector.shape_cast %27 : vector<32x128xf32> to vector<4x8x128xf32>
      %cst_21 = arith.constant dense<0.000000e+00> : vector<8x128xf32>
      %41 = vector.multi_reduction <add>, %40, %cst_21 [0] : vector<4x8x128xf32> to vector<8x128xf32>
      %42 = arith.addf %39, %41 : vector<8x128xf32>
      %c0_22 = arith.constant 0 : index
      %c0_23 = arith.constant 0 : index
      %43 = vector.load %arg5[%c0_22, %c0_23] : memref<8x128xf32, #tpu.memory_space<vmem>>, vector<8x128xf32>
      tpu.vector_store %arg5[%c0_22, %c0_23], %42 {strides = array<i32>} : memref<8x128xf32, #tpu.memory_space<vmem>>, vector<8x128xf32>,
    } else {
    }
    %c0_i32_12 = arith.constant 0 : i32
    %31 = arith.cmpi eq, %arg0, %c0_i32_12 : i32
    %32 = arith.extui %31 : i1 to i32
    %c0_i32_13 = arith.constant 0 : i32
    %33 = arith.cmpi ne, %32, %c0_i32_13 : i32
    scf.if %33 {
      %cst_14 = arith.constant 0.000000e+00 : f32
      %34 = vector.broadcast %cst_14 : f32 to vector<32x128xf32>
      %35 = arith.cmpf oge, %8, %34 : vector<32x128xf32>
      %cst_15 = arith.constant 0.000000e+00 : f32
      %36 = vector.broadcast %cst_15 : f32 to vector<32x128xf32>
      %37 = arith.select %35, %22, %36 : vector<32x128xi1>, vector<32x128xf32>
      %cst_16 = arith.constant 0.000000e+00 : f32
      %38 = vector.broadcast %cst_16 : f32 to vector<32x128xf32>
      %39 = arith.select %35, %27, %38 : vector<32x128xi1>, vector<32x128xf32>
      %c0_17 = arith.constant 0 : index
      %c0_18 = arith.constant 0 : index
      %40 = vector.load %arg4[%c0_17, %c0_18] : memref<8x128xf32, #tpu.memory_space<vmem>>, vector<8x128xf32>
      %41 = vector.shape_cast %37 : vector<32x128xf32> to vector<4x8x128xf32>
      %cst_19 = arith.constant dense<0.000000e+00> : vector<8x128xf32>
      %42 = vector.multi_reduction <add>, %41, %cst_19 [0] : vector<4x8x128xf32> to vector<8x128xf32>
      %43 = arith.addf %40, %42 : vector<8x128xf32>
      %c0_20 = arith.constant 0 : index
      %c0_21 = arith.constant 0 : index
      %44 = vector.load %arg4[%c0_20, %c0_21] : memref<8x128xf32, #tpu.memory_space<vmem>>, vector<8x128xf32>
      tpu.vector_store %arg4[%c0_20, %c0_21], %43 {strides = array<i32>} : memref<8x128xf32, #tpu.memory_space<vmem>>, vector<8x128xf32>,
      %c0_22 = arith.constant 0 : index
      %c0_23 = arith.constant 0 : index
      %45 = vector.load %arg5[%c0_22, %c0_23] : memref<8x128xf32, #tpu.memory_space<vmem>>, vector<8x128xf32>
      %46 = vector.shape_cast %39 : vector<32x128xf32> to vector<4x8x128xf32>
      %cst_24 = arith.constant dense<0.000000e+00> : vector<8x128xf32>
      %47 = vector.multi_reduction <add>, %46, %cst_24 [0] : vector<4x8x128xf32> to vector<8x128xf32>
      %48 = arith.addf %45, %47 : vector<8x128xf32>
      %c0_25 = arith.constant 0 : index
      %c0_26 = arith.constant 0 : index
      %49 = vector.load %arg5[%c0_25, %c0_26] : memref<8x128xf32, #tpu.memory_space<vmem>>, vector<8x128xf32>
      tpu.vector_store %arg5[%c0_25, %c0_26], %48 {strides = array<i32>} : memref<8x128xf32, #tpu.memory_space<vmem>>, vector<8x128xf32>,
      %c0_27 = arith.constant 0 : index
      %c0_28 = arith.constant 0 : index
      %50 = vector.load %arg4[%c0_27, %c0_28] : memref<8x128xf32, #tpu.memory_space<vmem>>, vector<8x128xf32>
      %51 = vector.shape_cast %50 : vector<8x128xf32> to vector<1x8x128xf32>
      %cst_29 = arith.constant dense<0.000000e+00> : vector<1xf32>
      %52 = vector.multi_reduction <add>, %51, %cst_29 [1, 2] : vector<1x8x128xf32> to vector<1xf32>
      %53 = vector.shape_cast %52 : vector<1xf32> to vector<1x1x1xf32>
      %54 = vector.extract %53[0, 0, 0] : f32 from vector<1x1x1xf32>
      %c0_30 = arith.constant 0 : index
      %c0_31 = arith.constant 0 : index
      %55 = vector.load %arg5[%c0_30, %c0_31] : memref<8x128xf32, #tpu.memory_space<vmem>>, vector<8x128xf32>
      %56 = vector.shape_cast %55 : vector<8x128xf32> to vector<1x8x128xf32>
      %cst_32 = arith.constant dense<0.000000e+00> : vector<1xf32>
      %57 = vector.multi_reduction <add>, %56, %cst_32 [1, 2] : vector<1x8x128xf32> to vector<1xf32>
      %58 = vector.shape_cast %57 : vector<1xf32> to vector<1x1x1xf32>
      %59 = vector.extract %58[0, 0, 0] : f32 from vector<1x1x1xf32>
      %60 = tpu.iota {dimensions = array<i32: 0>} : vector<8x128xi32>
      %c0_i32_33 = arith.constant 0 : i32
      %61 = vector.broadcast %c0_i32_33 : i32 to vector<8x128xi32>
      %62 = arith.cmpi eq, %60, %61 : vector<8x128xi32>
      %c1_i32 = arith.constant 1 : i32
      %63 = vector.broadcast %c1_i32 : i32 to vector<8x128xi32>
      %64 = arith.cmpi eq, %60, %63 : vector<8x128xi32>
      %cst_34 = arith.constant 0.000000e+00 : f32
      %65 = vector.broadcast %59 : f32 to vector<8x128xf32>
      %66 = vector.broadcast %cst_34 : f32 to vector<8x128xf32>
      %67 = arith.select %64, %65, %66 : vector<8x128xi1>, vector<8x128xf32>
      %68 = vector.broadcast %54 : f32 to vector<8x128xf32>
      %69 = arith.select %62, %68, %67 : vector<8x128xi1>, vector<8x128xf32>
      %c0_35 = arith.constant 0 : index
      %c0_36 = arith.constant 0 : index
      %70 = vector.load %arg3[%c0_35, %c0_36] : memref<8x128xf32, #tpu.memory_space<vmem>>, vector<8x128xf32>
      tpu.vector_store %arg3[%c0_35, %c0_36], %69 {strides = array<i32>} : memref<8x128xf32, #tpu.memory_space<vmem>>, vector<8x128xf32>,
    } else {
    }
    return
  }
  func.func @transform_0(%arg0: i32) -> (i32, i32, i32) {
    %c0_i32 = arith.constant 0 : i32
    %c0_i32_0 = arith.constant 0 : i32
    %c0_i32_1 = arith.constant 0 : i32
    return %c0_i32, %arg0, %c0_i32_0 : i32, i32, i32
  }
  func.func @transform_1(%arg0: i32) -> (i32, i32) {
    %c0_i32 = arith.constant 0 : i32
    %c0_i32_0 = arith.constant 0 : i32
    return %arg0, %c0_i32 : i32, i32
  }
  func.func @transform_2(%arg0: i32) -> (i32, i32) {
    %c0_i32 = arith.constant 0 : i32
    %c0_i32_0 = arith.constant 0 : i32
    %c0_i32_1 = arith.constant 0 : i32
    return %c0_i32, %c0_i32_0 : i32, i32
  }
}

</mosaic_0001>

<llo_original>
// kernel: tpu_custom_call.1
$region0: #{tpu_custom_call.1}
  #allocation0 [shape = 'u32[]', space=smem, size = 0x4, offset = 0x4, fixed_abs, tag = 'smem constant byte address 0x4 - core index']
  #allocation1 [shape = 'u32[72,128]{1,0:T(1,128)}', space=vmem, size = 0x9000, scoped, tag = 'internal scratch']
  #allocation2 [shape = 'f32[8,128]{1,0:T(8,128)}', space=vmem, size = 0x1000, scoped, tag = 'scratch operand']
  #allocation3 [shape = 'f32[8,128]{1,0:T(8,128)}', space=vmem, size = 0x1000, scoped, tag = 'scratch operand']
  %s0 = inlined_call_operand.hbm [shape: f32[2,32,128], index: 0, kind: input, shape index: {}]
  %s1 = inlined_call_operand.hbm [shape: s8[32,128], index: 1, kind: input, shape index: {}]
  %s2 = inlined_call_operand.hbm [shape: f32[8,128], index: 2, kind: output, shape index: {}]
  %s3 = sld [smem:[#allocation0]]
  $region38: #{tpu_custom_call.1} parent=0
    _
  %s5 = ssub.s32 1, %s3
  %s6 = scalar_select 0, %s5, %s3
  $region1: #{tpu_custom_call.1} parent=0
    #allocation4 [shape = 'u8[32768]{0}', space=vmem, size = 0x8000, scoped, tag = 'input window, operand 0, single buffered']
    #allocation5 [shape = 's32[1]{0}', space=sflag, size = 0x4, scoped, tag = 'scoped memory for tpu_custom_call.1']
    #allocation6 [shape = 's32[1]{0}', space=sflag, size = 0x4, scoped, tag = 'scoped memory for tpu_custom_call.1']
    #allocation7 [shape = 'u8[4096]{0}', space=vmem, size = 0x1000, scoped, tag = 'input window, operand 1, single buffered']
    #allocation8 [shape = 's32[1]{0}', space=sflag, size = 0x4, scoped, tag = 'scoped memory for tpu_custom_call.1']
    #allocation9 [shape = 'u8[4096]{0}', space=vmem, size = 0x1000, scoped, tag = 'output window, operand 0, single buffered']
    %7 = vsyncpa [#allocation5], 0
    %8 = vsyncpa [#allocation8], 0
    %9 = vsyncpa [#allocation6], 0
    // Predicated region
    $region2: #{tpu_custom_call.1} parent=1 // pred_check
      _
    $region3: #{tpu_custom_call.1} parent=1 // pred_check_branch
      %11 = sbr.rel (0) target = $region5
    $region4: #{tpu_custom_call.1} parent=1 // pred_region
      %13 = vsyncadd [#allocation5], 0
      %s14 = sshll.u32 %s0, 4
      %s15 = int_to_ptr.hbm [resolvable:$true] %s14
      %s16 = sshll.u32 [#allocation4], 4
      %s17 = int_to_ptr.vmem [resolvable:$true] %s16
      %22 = dma.hbm_to_vmem [thread:$0]  %s15, 1024, %s17, [#allocation5], 128, 128, 8
    $region5: #{tpu_custom_call.1} parent=1 // pred_fallthru
      _
    // Predicated region
    $region6: #{tpu_custom_call.1} parent=1 // pred_check
      _
    $region7: #{tpu_custom_call.1} parent=1 // pred_check_branch
      %24 = sbr.rel (0) target = $region9
    $region8: #{tpu_custom_call.1} parent=1 // pred_region
      %26 = vsyncadd [#allocation8], 0
      %s28 = sshll.u32 %s1, 4
      %s29 = int_to_ptr.hbm [resolvable:$true] %s28
      %s30 = sshll.u32 [#allocation7], 4
      %s31 = int_to_ptr.vmem [resolvable:$true] %s30
      %33 = dma.hbm_to_vmem [thread:$0]  %s29, 128, %s31, [#allocation8]
    $region9: #{tpu_custom_call.1} parent=1 // pred_fallthru
      _
    // Predicated region
    $region10: #{tpu_custom_call.1} parent=1 // pred_check
      _
    $region11: #{tpu_custom_call.1} parent=1 // pred_check_branch
      %35 = sbr.rel (0) target = $region13
    $region12: #{tpu_custom_call.1} parent=1 // pred_region
      %37 = dma.done [#allocation5], 1024
    $region13: #{tpu_custom_call.1} parent=1 // pred_fallthru
      _
    // Predicated region
    $region14: #{tpu_custom_call.1} parent=1 // pred_check
      _
    $region15: #{tpu_custom_call.1} parent=1 // pred_check_branch
      %39 = sbr.rel (0) target = $region17
    $region16: #{tpu_custom_call.1} parent=1 // pred_region
      %41 = dma.done [#allocation8], 128
    $region17: #{tpu_custom_call.1} parent=1 // pred_fallthru
      _
    %p42 = scmp.eq.s32.totalorder 0, 0
    // Predicated region
    $region18: #{tpu_custom_call.1} parent=1 // pred_check
      %p43 = pneg %p42
    $region19: #{tpu_custom_call.1} parent=1 // pred_check_branch
      %45 = sbr.rel (%p43) target = $region21
    $region20: #{tpu_custom_call.1} parent=1 // pred_region
      %46 = vst [vmem:[#allocation2] sm:$0xff] 0.0
      %47 = vst [vmem:[#allocation3] sm:$0xff] 0.0
    $region21: #{tpu_custom_call.1} parent=1 // pred_fallthru
      _
    %v48 = vld [vmem:[#allocation4] sm:$0xff]
    %v49 = vld [vmem:[#allocation4 + $0x8] sm:$0xff]
    %v50 = vld [vmem:[#allocation4 + $0x10] sm:$0xff]
    %v51 = vld [vmem:[#allocation4 + $0x18] sm:$0xff]
    %s52 = scalar_lea.vmem [#allocation4], 32
    %v53 = vld [vmem:[%s52] sm:$0xff]
    %v54 = vld [vmem:[%s52 + $0x8] sm:$0xff]
    %v55 = vld [vmem:[%s52 + $0x10] sm:$0xff]
    %v56 = vld [vmem:[%s52 + $0x18] sm:$0xff]
    %v57 = vld [vmem:[#allocation7] sm:$0xff]
    %v58 = vunpack.c.0.s8 %v57
    %v59 = vunpack.c.1.s8 %v57
    %v60 = vunpack.c.2.s8 %v57
    %v61 = vunpack.c.3.s8 %v57
    %v62 = vcvt.s32.f32 %v58
    %v63 = vcvt.s32.f32 %v59
    %v64 = vcvt.s32.f32 %v60
    %v65 = vcvt.s32.f32 %v61
    %v66 = vsub.f32 %v53, %v48
    %v67 = vsub.f32 %v54, %v49
    %v68 = vsub.f32 %v55, %v50
    %v69 = vsub.f32 %v56, %v51
    %v70 = vmul.f32 %v62, 2.0
    %v71 = vmul.f32 %v63, 2.0
    %v72 = vmul.f32 %v64, 2.0
    %v73 = vmul.f32 %v65, 2.0
    %v74 = vsub.f32 1.0, %v70
    %v75 = vsub.f32 1.0, %v71
    %v76 = vsub.f32 1.0, %v72
    %v77 = vsub.f32 1.0, %v73
    %v78 = vmul.f32 %v66, %v74
    %v79 = vmul.f32 %v67, %v75
    %v80 = vmul.f32 %v68, %v76
    %v81 = vmul.f32 %v69, %v77
    %v82 = vmax.f32 %v78, 0.0
    %v83 = vmax.f32 %v79, 0.0
    %v84 = vmax.f32 %v80, 0.0
    %v85 = vmax.f32 %v81, 0.0
    %v86 = vand.u32 2147483647, %v78
    %v87 = vand.u32 2147483647, %v79
    %v88 = vand.u32 2147483647, %v80
    %v89 = vand.u32 2147483647, %v81
    %v90 = vsub.f32 0.0, %v86
    %v91 = vsub.f32 0.0, %v87
    %v92 = vsub.f32 0.0, %v88
    %v93 = vsub.f32 0.0, %v89
    %v94 = vmul.f32 %v90, 1.442695
    %v95 = vpow.pop %v94
    %v96 = vmul.f32 %v91, 1.442695
    %v97 = vpow.pop %v96
    %v98 = vmul.f32 %v92, 1.442695
    %v99 = vpow.pop %v98
    %v100 = vmul.f32 %v93, 1.442695
    %v101 = vpow.pop %v100
    %v102 = vadd.f32 %v95, 1.0
    %v103 = vlog2.pop %v102
    %v104 = vmul.f32 %v103, 0.6931472
    %v105 = vmul.f32 -0.5, %v95
    %v106 = vadd.f32 %v105, 1.0
    %v107 = vmul.f32 %v106, %v95
    %v108 = vand.u32 2147483647, %v95
    %vm109 = vcmp.lt.f32.partialorder %v108, 0.0004427343
    %v110 = vsel %vm109, %v107, %v104
    %v111 = vadd.f32 %v97, 1.0
    %v112 = vlog2.pop %v111
    %v113 = vmul.f32 %v112, 0.6931472
    %v114 = vmul.f32 -0.5, %v97
    %v115 = vadd.f32 %v114, 1.0
    %v116 = vmul.f32 %v115, %v97
    %v117 = vand.u32 2147483647, %v97
    %vm118 = vcmp.lt.f32.partialorder %v117, 0.0004427343
    %v119 = vsel %vm118, %v116, %v113
    %v120 = vadd.f32 %v99, 1.0
    %v121 = vlog2.pop %v120
    %v122 = vmul.f32 %v121, 0.6931472
    %v123 = vmul.f32 -0.5, %v99
    %v124 = vadd.f32 %v123, 1.0
    %v125 = vmul.f32 %v124, %v99
    %v126 = vand.u32 2147483647, %v99
    %vm127 = vcmp.lt.f32.partialorder %v126, 0.0004427343
    %v128 = vsel %vm127, %v125, %v122
    %v129 = vadd.f32 %v101, 1.0
    %v130 = vlog2.pop %v129
    %v131 = vmul.f32 %v130, 0.6931472
    %v132 = vmul.f32 -0.5, %v101
    %v133 = vadd.f32 %v132, 1.0
    %v134 = vmul.f32 %v133, %v101
    %v135 = vand.u32 2147483647, %v101
    %vm136 = vcmp.lt.f32.partialorder %v135, 0.0004427343
    %v137 = vsel %vm136, %v134, %v131
    %v138 = vadd.f32 %v82, %v110
    %v139 = vadd.f32 %v83, %v119
    %v140 = vadd.f32 %v84, %v128
    %v141 = vadd.f32 %v85, %v137
    %v142 = vmul.f32 %v48, %v48
    %v143 = vmul.f32 %v49, %v49
    %v144 = vmul.f32 %v50, %v50
    %v145 = vmul.f32 %v51, %v51
    %v146 = vmul.f32 %v53, %v53
    %v147 = vmul.f32 %v54, %v54
    %v148 = vmul.f32 %v55, %v55
    %v149 = vmul.f32 %v56, %v56
    %v150 = vsub.f32 %v142, %v146
    %v151 = vsub.f32 %v143, %v147
    %v152 = vsub.f32 %v144, %v148
    %v153 = vsub.f32 %v145, %v149
    %v154 = vmul.f32 %v62, %v150
    %v155 = vmul.f32 %v63, %v151
    %v156 = vmul.f32 %v64, %v152
    %v157 = vmul.f32 %v65, %v153
    %v158 = vadd.f32 %v146, %v154
    %v159 = vadd.f32 %v147, %v155
    %v160 = vadd.f32 %v148, %v156
    %v161 = vadd.f32 %v149, %v157
    %p162 = scmp.lt.s32.totalorder 0, 0
    // Predicated region
    $region22: #{tpu_custom_call.1} parent=1 // pred_check
      %p163 = pneg %p162
    $region23: #{tpu_custom_call.1} parent=1 // pred_check_branch
      %165 = sbr.rel (%p163) target = $region25
    $region24: #{tpu_custom_call.1} parent=1 // pred_region
      %v166 = vld [vmem:[#allocation2] sm:$0xff]
      %v167 = vadd.f32 %v138, %v139
      %v168 = vadd.f32 %v167, %v140
      %v169 = vadd.f32 %v168, %v141
      %v170 = vadd.f32 %v166, %v169
      %171 = vst [vmem:[#allocation2] sm:$0xff] %v170
      %v172 = vld [vmem:[#allocation3] sm:$0xff]
      %v173 = vadd.f32 %v158, %v159
      %v174 = vadd.f32 %v173, %v160
      %v175 = vadd.f32 %v174, %v161
      %v176 = vadd.f32 %v172, %v175
      %177 = vst [vmem:[#allocation3] sm:$0xff] %v176
    $region25: #{tpu_custom_call.1} parent=1 // pred_fallthru
      _
    // Predicated region
    $region26: #{tpu_custom_call.1} parent=1 // pred_check
      %p178 = pneg %p42
    $region27: #{tpu_custom_call.1} parent=1 // pred_check_branch
      %180 = sbr.rel (%p178) target = $region29
    $region28: #{tpu_custom_call.1} parent=1 // pred_region
      %vm181 = vcmp.ge.f32.partialorder %v62, 0.0
      %vm182 = vcmp.ge.f32.partialorder %v63, 0.0
      %vm183 = vcmp.ge.f32.partialorder %v64, 0.0
      %vm184 = vcmp.ge.f32.partialorder %v65, 0.0
      %v185 = vsel %vm181, %v138, 0.0
      %v186 = vsel %vm182, %v139, 0.0
      %v187 = vsel %vm183, %v140, 0.0
      %v188 = vsel %vm184, %v141, 0.0
      %v189 = vsel %vm181, %v158, 0.0
      %v190 = vsel %vm182, %v159, 0.0
      %v191 = vsel %vm183, %v160, 0.0
      %v192 = vsel %vm184, %v161, 0.0
      %v193 = vld [vmem:[#allocation2] sm:$0xff]
      %v194 = vadd.f32 %v185, %v186
      %v195 = vadd.f32 %v194, %v187
      %v196 = vadd.f32 %v195, %v188
      %v197 = vadd.f32 %v193, %v196
      %198 = vst [vmem:[#allocation2] sm:$0xff] %v197
      %v199 = vld [vmem:[#allocation3] sm:$0xff]
      %v200 = vadd.f32 %v189, %v190
      %v201 = vadd.f32 %v200, %v191
      %v202 = vadd.f32 %v201, %v192
      %v203 = vadd.f32 %v199, %v202
      %204 = vst [vmem:[#allocation3] sm:$0xff] %v203
      %v205 = vld [vmem:[#allocation2] sm:$0xff]
      %206 = vadd.xlane.f32.xlu0 %v205
      %v207 = vpop.xlane.xlu0 %206
      %v208 = vrot.slane %v207, 4
      %v209 = vadd.f32 %v207, %v208
      %v210 = vrot.slane %v209, 2
      %v211 = vadd.f32 %v209, %v210
      %v212 = vrot.slane %v211, 1
      %v213 = vadd.f32 %v211, %v212
      %s214 = vtos %v213
      %v215 = vld [vmem:[#allocation3] sm:$0xff]
      %216 = vadd.xlane.f32.xlu0 %v215
      %v217 = vpop.xlane.xlu0 %216
      %v218 = vrot.slane %v217, 4
      %v219 = vadd.f32 %v217, %v218
      %v220 = vrot.slane %v219, 2
      %v221 = vadd.f32 %v219, %v220
      %v222 = vrot.slane %v221, 1
      %v223 = vadd.f32 %v221, %v222
      %s224 = vtos %v223
      %v225 = vlaneseq
      %v226 = vshrl.u32 %v225, 7
      %vm227 = vcmp.eq.s32.totalorder %v226, 0
      %vm228 = vcmp.eq.s32.totalorder %v226, 1
      %v229 = vstv %s224
      %v230 = vsel %vm228, %v229, 0.0
      %v231 = vstv %s214
      %v232 = vsel %vm227, %v231, %v230
      %233 = vst [vmem:[#allocation9] sm:$0xff] %v232
    $region29: #{tpu_custom_call.1} parent=1 // pred_fallthru
      _
    // Predicated region
    $region30: #{tpu_custom_call.1} parent=1 // pred_check
      _
    $region31: #{tpu_custom_call.1} parent=1 // pred_check_branch
      %235 = sbr.rel (0) target = $region33
    $region32: #{tpu_custom_call.1} parent=1 // pred_region
      %237 = vsyncadd [#allocation6], 0
      %s239 = sshll.u32 [#allocation9], 4
      %s240 = int_to_ptr.vmem [resolvable:$true] %s239
      %s241 = sshll.u32 %s2, 4
      %s242 = int_to_ptr.hbm [resolvable:$true] %s241
      %244 = dma.vmem_to_hbm [thread:$0]  %s240, 128, %s242, [#allocation6]
    $region33: #{tpu_custom_call.1} parent=1 // pred_fallthru
      _
    // Predicated region
    $region34: #{tpu_custom_call.1} parent=1 // pred_check
      _
    $region35: #{tpu_custom_call.1} parent=1 // pred_check_branch
      %246 = sbr.rel (0) target = $region37
    $region36: #{tpu_custom_call.1} parent=1 // pred_region
      %248 = dma.done [#allocation6], 128
    $region37: #{tpu_custom_call.1} parent=1 // pred_fallthru
      _
    %249 = vsyncpa [#allocation5], 1
    %250 = vsyncpa [#allocation8], 1
    %251 = vsyncpa [#allocation6], 1

</llo_original>
